<compile_context>
chip_gen: v7x
topology: tpu7x:2x2x1
jax: 0.10.0
libtpu: 0.0.40
codegen_flags: <defaults>
</compile_context>

<pallas_src>
import jax
import jax.numpy as jnp
from jax.experimental import pallas as pl
from jax.experimental.pallas import tpu as pltpu

# --- scaled-down CDSSM constants ---
SEQ  = 8      # word-trigram positions per document
D    = 128    # WORD_DEPTH (original: 3 * 30000)
K    = 128    # conv output channels (original: 300)
L    = 128    # semantic dim
J    = 4      # number of negative docs
NDOC = J + 1  # pos + negs


# --------------------------------------------------------------------------
# Fused kernel: conv(k=1) + tanh + max-pool + linear + tanh for query and all
# docs, then gamma-scaled dot-product scores.
# --------------------------------------------------------------------------
def cdssm_kernel(q_ref, docs_ref,
                 wcq_ref, bcq_ref, wsq_ref, bsq_ref,
                 wcd_ref, bcd_ref, wsd_ref, bsd_ref,
                 gamma_ref, out_ref, dk_ref):
    # q_ref   : (SEQ, D)            query positions
    # docs_ref: (NDOC*SEQ, D)       pos + negs, stacked along the row axis
    # wcq/wcd : (D, K)  conv weights (pre-transposed), bcq/bcd: (1, K)
    # wsq/wsd : (K, L)  sem weights  (pre-transposed), bsq/bsd: (1, L)
    # gamma_ref: SMEM (2,)  [gamma_w, gamma_b]  (learn_gamma = Conv1d(1,1,1))
    # out_ref : (1, NDOC)   scores, row-major in lanes
    # dk_ref  : VMEM scratch (NDOC, K) for the pooled doc features

    # --- query branch ---
    qc = jnp.tanh(jnp.dot(q_ref[...], wcq_ref[...],
                          preferred_element_type=jnp.float32) + bcq_ref[...])   # (SEQ, K)
    qk = jnp.max(qc, axis=0, keepdims=True)                                     # (1, K)
    q_s = jnp.tanh(jnp.dot(qk, wsq_ref[...],
                           preferred_element_type=jnp.float32) + bsq_ref[...])  # (1, L)

    # --- doc branch: all NDOC docs in one MXU pass ---
    dc = jnp.tanh(jnp.dot(docs_ref[...], wcd_ref[...],
                          preferred_element_type=jnp.float32) + bcd_ref[...])   # (NDOC*SEQ, K)
    # k-max pooling (k=1) per document: max over each doc's SEQ rows.
    # Rows are tile-aligned (SEQ == 8 sublanes per doc); assemble via VMEM scratch.
    for i in range(NDOC):
        dk_ref[i:i + 1, :] = jnp.max(dc[i * SEQ:(i + 1) * SEQ, :],
                                     axis=0, keepdims=True)
    dk = dk_ref[...]                                                             # (NDOC, K)
    doc_s = jnp.tanh(jnp.dot(dk, wsd_ref[...],
                             preferred_element_type=jnp.float32) + bsd_ref[...]) # (NDOC, L)

    # --- scores: q_s . doc_s_i over L on the MXU (Q @ K^T pattern) + gamma affine ---
    dots = jax.lax.dot_general(q_s, doc_s, (((1,), (1,)), ((), ())),
                               preferred_element_type=jnp.float32)               # (1, NDOC)
    out_ref[...] = gamma_ref[0] * dots + gamma_ref[1]


def cdssm_forward(params, q, docs):
    """q: (1, SEQ, D); docs: (NDOC, SEQ, D) pre-stacked (pos first, then negs).
    Returns (J+1, 1, 1) as in the PyTorch module."""
    q2d = q.reshape(SEQ, D)                 # contiguous reshape: free in XLA
    docs2d = docs.reshape(NDOC * SEQ, D)

    vmem = pl.BlockSpec(memory_space=pltpu.MemorySpace.VMEM)
    smem = pl.BlockSpec(memory_space=pltpu.MemorySpace.SMEM)

    scores = pl.pallas_call(
        cdssm_kernel,
        out_shape=jax.ShapeDtypeStruct((1, NDOC), jnp.float32),
        in_specs=[vmem, vmem,                    # q, docs
                  vmem, vmem, vmem, vmem,        # query conv/sem weights + biases
                  vmem, vmem, vmem, vmem,        # doc   conv/sem weights + biases
                  smem],                         # gamma scalars
        out_specs=vmem,
        scratch_shapes=[pltpu.VMEM((NDOC, K), jnp.float32)],
    )(q2d, docs2d,
      params["wq_conv"], params["bq_conv"], params["wq_sem"], params["bq_sem"],
      params["wd_conv"], params["bd_conv"], params["wd_sem"], params["bd_sem"],
      params["gamma"])

    # PyTorch: learn_gamma(dots.resize(J+1, 1, 1)) -> (J+1, 1, 1)
    return scores.reshape(NDOC, 1, 1)


def init_params(key):
    ks = jax.random.split(key, 9)
    scale = 0.1
    return {
        # Conv1d weights stored pre-transposed: (D, K) == PyTorch (K, D, 1) weight^T.
        "wq_conv": scale * jax.random.normal(ks[0], (D, K), jnp.float32),
        "bq_conv": scale * jax.random.normal(ks[1], (1, K), jnp.float32),
        # Linear weights stored pre-transposed: (K, L) == PyTorch (L, K) weight^T.
        "wq_sem":  scale * jax.random.normal(ks[2], (K, L), jnp.float32),
        "bq_sem":  scale * jax.random.normal(ks[3], (1, L), jnp.float32),
        "wd_conv": scale * jax.random.normal(ks[4], (D, K), jnp.float32),
        "bd_conv": scale * jax.random.normal(ks[5], (1, K), jnp.float32),
        "wd_sem":  scale * jax.random.normal(ks[6], (K, L), jnp.float32),
        "bd_sem":  scale * jax.random.normal(ks[7], (1, L), jnp.float32),
        # learn_gamma = Conv1d(1,1,1): [weight, bias] scalars (kept in SMEM).
        "gamma":   scale * jax.random.normal(ks[8], (2,), jnp.float32),
    }


def reference_forward(params, q, docs):
    """Plain-JAX reference mirroring the PyTorch forward (raw dot products, no
    cosine normalization, exactly as in the given module)."""
    hp = jax.lax.Precision.HIGHEST

    def sem(x2d, wc, bc, ws, bs):
        c = jnp.tanh(jnp.dot(x2d, wc, precision=hp) + bc)   # (SEQ, K)
        k = jnp.max(c, axis=0, keepdims=True)                # (1, K)
        return jnp.tanh(jnp.dot(k, ws, precision=hp) + bs)[0]  # (L,)

    q_s = sem(q.reshape(SEQ, D), params["wq_conv"], params["bq_conv"],
              params["wq_sem"], params["bq_sem"])
    doc_s = jnp.stack([sem(docs[i], params["wd_conv"], params["bd_conv"],
                           params["wd_sem"], params["bd_sem"])
                       for i in range(NDOC)])                # (NDOC, L)
    dots = jnp.dot(doc_s, q_s, precision=hp)                 # (NDOC,)
    return (params["gamma"][0] * dots + params["gamma"][1]).reshape(NDOC, 1, 1)


if __name__ == "__main__":
    key = jax.random.PRNGKey(0)
    kp, kq, kpos, kneg = jax.random.split(key, 4)

    params = init_params(kp)
    q = jax.random.normal(kq, (1, SEQ, D), jnp.float32)
    pos = jax.random.normal(kpos, (1, SEQ, D), jnp.float32)
    negs = [jax.random.normal(k, (1, SEQ, D), jnp.float32)
            for k in jax.random.split(kneg, J)]

    # Stack pos + negs once, outside the hot path (avoids a per-call HBM concat).
    docs = jnp.concatenate([pos] + negs, axis=0)             # (NDOC, SEQ, D)

    fwd = jax.jit(cdssm_forward)
    out = jax.block_until_ready(fwd(params, q, docs))

    ref = reference_forward(params, q, docs)
    assert out.shape == (J + 1, 1, 1), out.shape
    assert jnp.allclose(out, ref, atol=1e-4, rtol=1e-4), (out, ref)

    print("KERNEL_OK")
</pallas_src>

<mosaic_0001>
module attributes {stable_mosaic.version = 11 : i64} {
  func.func @cdssm_kernel(%arg0: memref<8x128xf32, #tpu.memory_space<vmem>>, %arg1: memref<40x128xf32, #tpu.memory_space<vmem>>, %arg2: memref<128x128xf32, #tpu.memory_space<vmem>>, %arg3: memref<1x128xf32, #tpu.memory_space<vmem>>, %arg4: memref<128x128xf32, #tpu.memory_space<vmem>>, %arg5: memref<1x128xf32, #tpu.memory_space<vmem>>, %arg6: memref<128x128xf32, #tpu.memory_space<vmem>>, %arg7: memref<1x128xf32, #tpu.memory_space<vmem>>, %arg8: memref<128x128xf32, #tpu.memory_space<vmem>>, %arg9: memref<1x128xf32, #tpu.memory_space<vmem>>, %arg10: memref<2xf32, #tpu.memory_space<smem>>, %arg11: memref<1x5xf32, #tpu.memory_space<vmem>>, %arg12: memref<5x128xf32, #tpu.memory_space<vmem>>) attributes {dimension_semantics = [], scalar_prefetch = 0 : i64, scratch_operands = 1 : i64, tpu.core_type = #tpu.core_type<tc>} {
    %c0 = arith.constant 0 : index
    %c0_0 = arith.constant 0 : index
    %0 = vector.load %arg0[%c0, %c0_0] : memref<8x128xf32, #tpu.memory_space<vmem>>, vector<8x128xf32>
    %c0_1 = arith.constant 0 : index
    %c0_2 = arith.constant 0 : index
    %1 = vector.load %arg2[%c0_1, %c0_2] : memref<128x128xf32, #tpu.memory_space<vmem>>, vector<128x128xf32>
    %cst = arith.constant dense<0.000000e+00> : vector<8x128xf32>
    %2 = tpu.matmul %0, %1, %cst {dimension_numbers = #tpu.dot_dimension_numbers<[1], [0], [0], [1], [0, 0, 1, 1], [], []>} : vector<8x128xf32>, vector<128x128xf32>, vector<8x128xf32> -> vector<8x128xf32>
    %c0_3 = arith.constant 0 : index
    %c0_4 = arith.constant 0 : index
    %3 = vector.load %arg3[%c0_3, %c0_4] : memref<1x128xf32, #tpu.memory_space<vmem>>, vector<1x128xf32>
    %4 = vector.broadcast %3 : vector<1x128xf32> to vector<8x128xf32>
    %5 = arith.addf %2, %4 : vector<8x128xf32>
    %6 = math.tanh %5 : vector<8x128xf32>
    %cst_5 = arith.constant dense<0xFF800000> : vector<128xf32>
    %7 = vector.multi_reduction <maximumf>, %6, %cst_5 [0] : vector<8x128xf32> to vector<128xf32>
    %8 = vector.shape_cast %7 : vector<128xf32> to vector<1x128xf32>
    %c0_6 = arith.constant 0 : index
    %c0_7 = arith.constant 0 : index
    %9 = vector.load %arg4[%c0_6, %c0_7] : memref<128x128xf32, #tpu.memory_space<vmem>>, vector<128x128xf32>
    %cst_8 = arith.constant dense<0.000000e+00> : vector<1x128xf32>
    %10 = tpu.matmul %8, %9, %cst_8 {dimension_numbers = #tpu.dot_dimension_numbers<[1], [0], [0], [1], [0, 0, 1, 1], [], []>} : vector<1x128xf32>, vector<128x128xf32>, vector<1x128xf32> -> vector<1x128xf32>
    %c0_9 = arith.constant 0 : index
    %c0_10 = arith.constant 0 : index
    %11 = vector.load %arg5[%c0_9, %c0_10] : memref<1x128xf32, #tpu.memory_space<vmem>>, vector<1x128xf32>
    %12 = arith.addf %10, %11 : vector<1x128xf32>
    %13 = math.tanh %12 : vector<1x128xf32>
    %c0_11 = arith.constant 0 : index
    %c0_12 = arith.constant 0 : index
    %14 = vector.load %arg1[%c0_11, %c0_12] : memref<40x128xf32, #tpu.memory_space<vmem>>, vector<40x128xf32>
    %c0_13 = arith.constant 0 : index
    %c0_14 = arith.constant 0 : index
    %15 = vector.load %arg6[%c0_13, %c0_14] : memref<128x128xf32, #tpu.memory_space<vmem>>, vector<128x128xf32>
    %cst_15 = arith.constant dense<0.000000e+00> : vector<40x128xf32>
    %16 = tpu.matmul %14, %15, %cst_15 {dimension_numbers = #tpu.dot_dimension_numbers<[1], [0], [0], [1], [0, 0, 1, 1], [], []>} : vector<40x128xf32>, vector<128x128xf32>, vector<40x128xf32> -> vector<40x128xf32>
    %c0_16 = arith.constant 0 : index
    %c0_17 = arith.constant 0 : index
    %17 = vector.load %arg7[%c0_16, %c0_17] : memref<1x128xf32, #tpu.memory_space<vmem>>, vector<1x128xf32>
    %18 = vector.broadcast %17 : vector<1x128xf32> to vector<40x128xf32>
    %19 = arith.addf %16, %18 : vector<40x128xf32>
    %20 = math.tanh %19 : vector<40x128xf32>
    %21 = vector.extract_strided_slice %20 {offsets = [0, 0], sizes = [8, 128], strides = [1, 1]} : vector<40x128xf32> to vector<8x128xf32>
    %cst_18 = arith.constant dense<0xFF800000> : vector<128xf32>
    %22 = vector.multi_reduction <maximumf>, %21, %cst_18 [0] : vector<8x128xf32> to vector<128xf32>
    %23 = vector.shape_cast %22 : vector<128xf32> to vector<1x128xf32>
    %c0_19 = arith.constant 0 : index
    %c0_20 = arith.constant 0 : index
    %24 = vector.load %arg12[%c0_19, %c0_20] : memref<5x128xf32, #tpu.memory_space<vmem>>, vector<1x128xf32>
    tpu.vector_store %arg12[%c0_19, %c0_20], %23 {strides = array<i32>} : memref<5x128xf32, #tpu.memory_space<vmem>>, vector<1x128xf32>,
    %25 = vector.extract_strided_slice %20 {offsets = [8, 0], sizes = [8, 128], strides = [1, 1]} : vector<40x128xf32> to vector<8x128xf32>
    %cst_21 = arith.constant dense<0xFF800000> : vector<128xf32>
    %26 = vector.multi_reduction <maximumf>, %25, %cst_21 [0] : vector<8x128xf32> to vector<128xf32>
    %27 = vector.shape_cast %26 : vector<128xf32> to vector<1x128xf32>
    %c1 = arith.constant 1 : index
    %c0_22 = arith.constant 0 : index
    %28 = vector.load %arg12[%c1, %c0_22] : memref<5x128xf32, #tpu.memory_space<vmem>>, vector<1x128xf32>
    tpu.vector_store %arg12[%c1, %c0_22], %27 {strides = array<i32>} : memref<5x128xf32, #tpu.memory_space<vmem>>, vector<1x128xf32>,
    %29 = vector.extract_strided_slice %20 {offsets = [16, 0], sizes = [8, 128], strides = [1, 1]} : vector<40x128xf32> to vector<8x128xf32>
    %cst_23 = arith.constant dense<0xFF800000> : vector<128xf32>
    %30 = vector.multi_reduction <maximumf>, %29, %cst_23 [0] : vector<8x128xf32> to vector<128xf32>
    %31 = vector.shape_cast %30 : vector<128xf32> to vector<1x128xf32>
    %c2 = arith.constant 2 : index
    %c0_24 = arith.constant 0 : index
    %32 = vector.load %arg12[%c2, %c0_24] : memref<5x128xf32, #tpu.memory_space<vmem>>, vector<1x128xf32>
    tpu.vector_store %arg12[%c2, %c0_24], %31 {strides = array<i32>} : memref<5x128xf32, #tpu.memory_space<vmem>>, vector<1x128xf32>,
    %33 = vector.extract_strided_slice %20 {offsets = [24, 0], sizes = [8, 128], strides = [1, 1]} : vector<40x128xf32> to vector<8x128xf32>
    %cst_25 = arith.constant dense<0xFF800000> : vector<128xf32>
    %34 = vector.multi_reduction <maximumf>, %33, %cst_25 [0] : vector<8x128xf32> to vector<128xf32>
    %35 = vector.shape_cast %34 : vector<128xf32> to vector<1x128xf32>
    %c3 = arith.constant 3 : index
    %c0_26 = arith.constant 0 : index
    %36 = vector.load %arg12[%c3, %c0_26] : memref<5x128xf32, #tpu.memory_space<vmem>>, vector<1x128xf32>
    tpu.vector_store %arg12[%c3, %c0_26], %35 {strides = array<i32>} : memref<5x128xf32, #tpu.memory_space<vmem>>, vector<1x128xf32>,
    %37 = vector.extract_strided_slice %20 {offsets = [32, 0], sizes = [8, 128], strides = [1, 1]} : vector<40x128xf32> to vector<8x128xf32>
    %cst_27 = arith.constant dense<0xFF800000> : vector<128xf32>
    %38 = vector.multi_reduction <maximumf>, %37, %cst_27 [0] : vector<8x128xf32> to vector<128xf32>
    %39 = vector.shape_cast %38 : vector<128xf32> to vector<1x128xf32>
    %c4 = arith.constant 4 : index
    %c0_28 = arith.constant 0 : index
    %40 = vector.load %arg12[%c4, %c0_28] : memref<5x128xf32, #tpu.memory_space<vmem>>, vector<1x128xf32>
    tpu.vector_store %arg12[%c4, %c0_28], %39 {strides = array<i32>} : memref<5x128xf32, #tpu.memory_space<vmem>>, vector<1x128xf32>,
    %c0_29 = arith.constant 0 : index
    %c0_30 = arith.constant 0 : index
    %41 = vector.load %arg12[%c0_29, %c0_30] : memref<5x128xf32, #tpu.memory_space<vmem>>, vector<5x128xf32>
    %c0_31 = arith.constant 0 : index
    %c0_32 = arith.constant 0 : index
    %42 = vector.load %arg8[%c0_31, %c0_32] : memref<128x128xf32, #tpu.memory_space<vmem>>, vector<128x128xf32>
    %cst_33 = arith.constant dense<0.000000e+00> : vector<5x128xf32>
    %43 = tpu.matmul %41, %42, %cst_33 {dimension_numbers = #tpu.dot_dimension_numbers<[1], [0], [0], [1], [0, 0, 1, 1], [], []>} : vector<5x128xf32>, vector<128x128xf32>, vector<5x128xf32> -> vector<5x128xf32>
    %c0_34 = arith.constant 0 : index
    %c0_35 = arith.constant 0 : index
    %44 = vector.load %arg9[%c0_34, %c0_35] : memref<1x128xf32, #tpu.memory_space<vmem>>, vector<1x128xf32>
    %45 = vector.broadcast %44 : vector<1x128xf32> to vector<5x128xf32>
    %46 = arith.addf %43, %45 : vector<5x128xf32>
    %47 = math.tanh %46 : vector<5x128xf32>
    %cst_36 = arith.constant dense<0.000000e+00> : vector<1x5xf32>
    %48 = tpu.matmul %13, %47, %cst_36 {dimension_numbers = #tpu.dot_dimension_numbers<[1], [1], [0], [0], [0, 0, 1, 0], [], []>} : vector<1x128xf32>, vector<5x128xf32>, vector<1x5xf32> -> vector<1x5xf32>
    %c0_37 = arith.constant 0 : index
    %49 = memref.load %arg10[%c0_37] : memref<2xf32, #tpu.memory_space<smem>>
    %50 = vector.broadcast %49 : f32 to vector<1x5xf32>
    %51 = arith.mulf %50, %48 : vector<1x5xf32>
    %c1_38 = arith.constant 1 : index
    %52 = memref.load %arg10[%c1_38] : memref<2xf32, #tpu.memory_space<smem>>
    %53 = vector.broadcast %52 : f32 to vector<1x5xf32>
    %54 = arith.addf %51, %53 : vector<1x5xf32>
    %c0_39 = arith.constant 0 : index
    %c0_40 = arith.constant 0 : index
    %55 = vector.load %arg11[%c0_39, %c0_40] : memref<1x5xf32, #tpu.memory_space<vmem>>, vector<1x5xf32>
    tpu.vector_store %arg11[%c0_39, %c0_40], %54 {strides = array<i32>} : memref<1x5xf32, #tpu.memory_space<vmem>>, vector<1x5xf32>,
    return
  }
}

</mosaic_0001>

<llo_original>
// kernel: cdssm_forward.1
$region0: #{cdssm_forward.1}
  #allocation0 [shape = 'u32[]', space=smem, size = 0x4, offset = 0x4, fixed_abs, tag = 'smem constant byte address 0x4 - core index']
  #allocation1 [shape = 'u32[144,128]{1,0:T(1,128)}', space=vmem, size = 0x12000, scoped, tag = 'internal scratch']
  #allocation2 [shape = 'f32[5,128]{1,0:T(8,128)}', space=vmem, size = 0x1000, scoped, tag = 'scratch operand']
  %s0 = inlined_call_operand.hbm [shape: f32[8,128], index: 0, kind: input, shape index: {}]
  %s1 = inlined_call_operand.vmem [shape: f32[40,128], index: 1, kind: input, shape index: {}]
  %s2 = inlined_call_operand.hbm [shape: f32[128,128], index: 2, kind: input, shape index: {}]
  %s3 = inlined_call_operand.vmem [shape: f32[1,128], index: 3, kind: input, shape index: {}]
  %s4 = inlined_call_operand.hbm [shape: f32[128,128], index: 4, kind: input, shape index: {}]
  %s5 = inlined_call_operand.vmem [shape: f32[1,128], index: 5, kind: input, shape index: {}]
  %s6 = inlined_call_operand.hbm [shape: f32[128,128], index: 6, kind: input, shape index: {}]
  %s7 = inlined_call_operand.vmem [shape: f32[1,128], index: 7, kind: input, shape index: {}]
  %s8 = inlined_call_operand.hbm [shape: f32[128,128], index: 8, kind: input, shape index: {}]
  %s9 = inlined_call_operand.vmem [shape: f32[1,128], index: 9, kind: input, shape index: {}]
  %s10 = inlined_call_operand.vmem [shape: f32[2], index: 10, kind: input, shape index: {}]
  %s11 = inlined_call_operand.hbm [shape: f32[1,5], index: 11, kind: output, shape index: {}]
  %s12 = sld [smem:[#allocation0]]
  $region78: #{cdssm_forward.1} parent=0
    _
  %s14 = ssub.s32 1, %s12
  %s15 = scalar_select 0, %s14, %s12
  $region1: #{cdssm_forward.1} parent=0
    #allocation3 [shape = 'u8[4096]{0}', space=vmem, size = 0x1000, scoped, tag = 'input window, operand 0, single buffered']
    #allocation4 [shape = 's32[1]{0}', space=sflag, size = 0x4, scoped, tag = 'scoped memory for cdssm_forward.1']
    #allocation5 [shape = 's32[1]{0}', space=sflag, size = 0x4, scoped, tag = 'scoped memory for cdssm_forward.1']
    #allocation6 [shape = 's32[1]{0}', space=sflag, size = 0x4, scoped, tag = 'scoped memory for cdssm_forward.1']
    #allocation7 [shape = 'u8[65536]{0}', space=vmem, size = 0x10000, scoped, tag = 'input window, operand 2, single buffered']
    #allocation8 [shape = 's32[1]{0}', space=sflag, size = 0x4, scoped, tag = 'scoped memory for cdssm_forward.1']
    #allocation9 [shape = 'u8[65536]{0}', space=vmem, size = 0x10000, scoped, tag = 'input window, operand 4, single buffered']
    #allocation10 [shape = 'u8[65536]{0}', space=vmem, size = 0x10000, scoped, tag = 'input window, operand 6, single buffered']
    #allocation11 [shape = 's32[1]{0}', space=sflag, size = 0x4, scoped, tag = 'scoped memory for cdssm_forward.1']
    #allocation12 [shape = 'u8[65536]{0}', space=vmem, size = 0x10000, scoped, tag = 'input window, operand 8, single buffered']
    #allocation13 [shape = 'u8[512]{0}', space=smem, size = 0x200, scoped, tag = 'input window, operand 10, single buffered']
    #allocation14 [shape = 'u8[512]{0}', space=vmem, size = 0x400, scoped, tag = 'output window, operand 0, single buffered']
    %16 = vsyncpa [#allocation4], 0
    %17 = vsyncpa [#allocation8], 0
    %18 = vsyncpa [#allocation11], 0
    %19 = vsyncpa [#allocation6], 0
    %20 = vsyncpa [#allocation5], 0
    // Predicated region
    $region2: #{cdssm_forward.1} parent=1 // pred_check
      _
    $region3: #{cdssm_forward.1} parent=1 // pred_check_branch
      %22 = sbr.rel (0) target = $region5
    $region4: #{cdssm_forward.1} parent=1 // pred_region
      %s24 = ssub.s32 128, 128
      %25 = vsyncadd [#allocation4], %s24
      %s27 = sshll.u32 [#allocation3], 4
      %s28 = int_to_ptr.vmem [resolvable:$true] %s27
      %30 = dma.hbm_to_vmem [thread:$0]  %s0, 128, %s28, [#allocation4]
    $region5: #{cdssm_forward.1} parent=1 // pred_fallthru
      _
    // Predicated region
    $region6: #{cdssm_forward.1} parent=1 // pred_check
      _
    $region7: #{cdssm_forward.1} parent=1 // pred_check_branch
      %32 = sbr.rel (0) target = $region9
    $region8: #{cdssm_forward.1} parent=1 // pred_region
      _
    $region9: #{cdssm_forward.1} parent=1 // pred_fallthru
      _
    // Predicated region
    $region10: #{cdssm_forward.1} parent=1 // pred_check
      _
    $region11: #{cdssm_forward.1} parent=1 // pred_check_branch
      %34 = sbr.rel (0) target = $region13
    $region12: #{cdssm_forward.1} parent=1 // pred_region
      %s36 = ssub.s32 2048, 2048
      %37 = vsyncadd [#allocation8], %s36
      %s38 = sshll.u32 [#allocation7], 4
      %s39 = int_to_ptr.vmem [resolvable:$true] %s38
      %44 = dma.hbm_to_vmem [thread:$0]  %s2, 2048, %s39, [#allocation8], 128, 128, 8
    $region13: #{cdssm_forward.1} parent=1 // pred_fallthru
      _
    // Predicated region
    $region14: #{cdssm_forward.1} parent=1 // pred_check
      _
    $region15: #{cdssm_forward.1} parent=1 // pred_check_branch
      %46 = sbr.rel (0) target = $region17
    $region16: #{cdssm_forward.1} parent=1 // pred_region
      _
    $region17: #{cdssm_forward.1} parent=1 // pred_fallthru
      _
    // Predicated region
    $region18: #{cdssm_forward.1} parent=1 // pred_check
      _
    $region19: #{cdssm_forward.1} parent=1 // pred_check_branch
      %48 = sbr.rel (0) target = $region21
    $region20: #{cdssm_forward.1} parent=1 // pred_region
      %s50 = ssub.s32 2048, 2048
      %51 = vsyncadd [#allocation8], %s50
      %s52 = sshll.u32 [#allocation9], 4
      %s53 = int_to_ptr.vmem [resolvable:$true] %s52
      %58 = dma.hbm_to_vmem [thread:$0]  %s4, 2048, %s53, [#allocation8], 128, 128, 8
    $region21: #{cdssm_forward.1} parent=1 // pred_fallthru
      _
    // Predicated region
    $region22: #{cdssm_forward.1} parent=1 // pred_check
      _
    $region23: #{cdssm_forward.1} parent=1 // pred_check_branch
      %60 = sbr.rel (0) target = $region25
    $region24: #{cdssm_forward.1} parent=1 // pred_region
      _
    $region25: #{cdssm_forward.1} parent=1 // pred_fallthru
      _
    // Predicated region
    $region26: #{cdssm_forward.1} parent=1 // pred_check
      _
    $region27: #{cdssm_forward.1} parent=1 // pred_check_branch
      %62 = sbr.rel (0) target = $region29
    $region28: #{cdssm_forward.1} parent=1 // pred_region
      %s64 = ssub.s32 2048, 2048
      %65 = vsyncadd [#allocation11], %s64
      %s66 = sshll.u32 [#allocation10], 4
      %s67 = int_to_ptr.vmem [resolvable:$true] %s66
      %72 = dma.hbm_to_vmem [thread:$0]  %s6, 2048, %s67, [#allocation11], 128, 128, 8
    $region29: #{cdssm_forward.1} parent=1 // pred_fallthru
      _
    // Predicated region
    $region30: #{cdssm_forward.1} parent=1 // pred_check
      _
    $region31: #{cdssm_forward.1} parent=1 // pred_check_branch
      %74 = sbr.rel (0) target = $region33
    $region32: #{cdssm_forward.1} parent=1 // pred_region
      _
    $region33: #{cdssm_forward.1} parent=1 // pred_fallthru
      _
    // Predicated region
    $region34: #{cdssm_forward.1} parent=1 // pred_check
      _
    $region35: #{cdssm_forward.1} parent=1 // pred_check_branch
      %76 = sbr.rel (0) target = $region37
    $region36: #{cdssm_forward.1} parent=1 // pred_region
      %s78 = ssub.s32 2048, 2048
      %79 = vsyncadd [#allocation11], %s78
      %s80 = sshll.u32 [#allocation12], 4
      %s81 = int_to_ptr.vmem [resolvable:$true] %s80
      %86 = dma.hbm_to_vmem [thread:$0]  %s8, 2048, %s81, [#allocation11], 128, 128, 8
    $region37: #{cdssm_forward.1} parent=1 // pred_fallthru
      _
    // Predicated region
    $region38: #{cdssm_forward.1} parent=1 // pred_check
      _
    $region39: #{cdssm_forward.1} parent=1 // pred_check_branch
      %88 = sbr.rel (0) target = $region41
    $region40: #{cdssm_forward.1} parent=1 // pred_region
      _
    $region41: #{cdssm_forward.1} parent=1 // pred_fallthru
      _
    // Predicated region
    $region42: #{cdssm_forward.1} parent=1 // pred_check
      _
    $region43: #{cdssm_forward.1} parent=1 // pred_check_branch
      %90 = sbr.rel (0) target = $region45
    $region44: #{cdssm_forward.1} parent=1 // pred_region
      %s92 = ssub.s32 16, 16
      %93 = vsyncadd [#allocation6], %s92
      %s95 = sshll.u32 %s10, 4
      %s96 = int_to_ptr.vmem [resolvable:$true] %s95
      %98 = dma.vmem_to_smem %s96, 16, [#allocation13], [#allocation6]
    $region45: #{cdssm_forward.1} parent=1 // pred_fallthru
      _
    // Predicated region
    $region46: #{cdssm_forward.1} parent=1 // pred_check
      _
    $region47: #{cdssm_forward.1} parent=1 // pred_check_branch
      %100 = sbr.rel (0) target = $region49
    $region48: #{cdssm_forward.1} parent=1 // pred_region
      %101 = dma.done [#allocation4], 128
    $region49: #{cdssm_forward.1} parent=1 // pred_fallthru
      _
    // Predicated region
    $region50: #{cdssm_forward.1} parent=1 // pred_check
      _
    $region51: #{cdssm_forward.1} parent=1 // pred_check_branch
      %103 = sbr.rel (0) target = $region53
    $region52: #{cdssm_forward.1} parent=1 // pred_region
      %104 = dma.done [#allocation8], 2048
    $region53: #{cdssm_forward.1} parent=1 // pred_fallthru
      _
    // Predicated region
    $region54: #{cdssm_forward.1} parent=1 // pred_check
      _
    $region55: #{cdssm_forward.1} parent=1 // pred_check_branch
      %106 = sbr.rel (0) target = $region57
    $region56: #{cdssm_forward.1} parent=1 // pred_region
      %107 = dma.done [#allocation8], 2048
    $region57: #{cdssm_forward.1} parent=1 // pred_fallthru
      _
    // Predicated region
    $region58: #{cdssm_forward.1} parent=1 // pred_check
      _
    $region59: #{cdssm_forward.1} parent=1 // pred_check_branch
      %109 = sbr.rel (0) target = $region61
    $region60: #{cdssm_forward.1} parent=1 // pred_region
      %110 = dma.done [#allocation11], 2048
    $region61: #{cdssm_forward.1} parent=1 // pred_fallthru
      _
    // Predicated region
    $region62: #{cdssm_forward.1} parent=1 // pred_check
      _
    $region63: #{cdssm_forward.1} parent=1 // pred_check_branch
      %112 = sbr.rel (0) target = $region65
    $region64: #{cdssm_forward.1} parent=1 // pred_region
      %113 = dma.done [#allocation11], 2048
    $region65: #{cdssm_forward.1} parent=1 // pred_fallthru
      _
    // Predicated region
    $region66: #{cdssm_forward.1} parent=1 // pred_check
      _
    $region67: #{cdssm_forward.1} parent=1 // pred_check_branch
      %115 = sbr.rel (0) target = $region69
    $region68: #{cdssm_forward.1} parent=1 // pred_region
      %116 = dma.done [#allocation6], 16
    $region69: #{cdssm_forward.1} parent=1 // pred_fallthru
      _
    %117 = sfence
    %v118 = vld [vmem:[#allocation3] sm:$0xff]
    %v119 = vld [vmem:[#allocation7] sm:$0xff]
    %v120 = vld [vmem:[#allocation7 + $0x8] sm:$0xff]
    %v121 = vld [vmem:[#allocation7 + $0x10] sm:$0xff]
    %v122 = vld [vmem:[#allocation7 + $0x18] sm:$0xff]
    %v123 = vld [vmem:[#allocation7 + $0x20] sm:$0xff]
    %v124 = vld [vmem:[#allocation7 + $0x28] sm:$0xff]
    %v125 = vld [vmem:[#allocation7 + $0x30] sm:$0xff]
    %v126 = vld [vmem:[#allocation7 + $0x38] sm:$0xff]
    %v127 = vld [vmem:[#allocation7 + $0x40] sm:$0xff]
    %v128 = vld [vmem:[#allocation7 + $0x48] sm:$0xff]
    %v129 = vld [vmem:[#allocation7 + $0x50] sm:$0xff]
    %v130 = vld [vmem:[#allocation7 + $0x58] sm:$0xff]
    %v131 = vld [vmem:[#allocation7 + $0x60] sm:$0xff]
    %v132 = vld [vmem:[#allocation7 + $0x68] sm:$0xff]
    %v133 = vld [vmem:[#allocation7 + $0x70] sm:$0xff]
    %v134 = vld [vmem:[#allocation7 + $0x78] sm:$0xff]
    %v135 = vld [vmem:[%s3] sm:$0x1]
    %v137 = vlaneseq
    %v138 = vshrl.u32 %v137, 7
    %v139 = vsub.s32 0, %v138
    %v140 = vrot.slane %v135, %v139
    %142 = vmatprep.subr.mxu0 0.0
    %143 = vmatpush1.msra.mxu0 %v119
    %144 = vmatprep.subr.mxu0 0.0
    %145 = vmatpush1.msra.mxu0 %v120
    %146 = vmatprep.subr.mxu0 0.0
    %147 = vmatpush1.msra.mxu0 %v121
    %148 = vmatprep.subr.mxu0 0.0
    %149 = vmatpush1.msra.mxu0 %v122
    %150 = vmatprep.subr.mxu0 0.0
    %151 = vmatpush1.msra.mxu0 %v123
    %152 = vmatprep.subr.mxu0 0.0
    %153 = vmatpush1.msra.mxu0 %v124
    %154 = vmatprep.subr.mxu0 0.0
    %155 = vmatpush1.msra.mxu0 %v125
    %156 = vmatprep.subr.mxu0 0.0
    %157 = vmatpush1.msra.mxu0 %v126
    %158 = vmatprep.subr.mxu0 0.0
    %159 = vmatpush1.msra.mxu0 %v127
    %160 = vmatprep.subr.mxu0 0.0
    %161 = vmatpush1.msra.mxu0 %v128
    %162 = vmatprep.subr.mxu0 0.0
    %163 = vmatpush1.msra.mxu0 %v129
    %164 = vmatprep.subr.mxu0 0.0
    %165 = vmatpush1.msra.mxu0 %v130
    %166 = vmatprep.subr.mxu0 0.0
    %167 = vmatpush1.msra.mxu0 %v131
    %168 = vmatprep.subr.mxu0 0.0
    %169 = vmatpush1.msra.mxu0 %v132
    %170 = vmatprep.subr.mxu0 0.0
    %171 = vmatpush1.msra.mxu0 %v133
    %172 = vmatprep.subr.mxu0 0.0
    %173 = vmatpush1.msra.mxu0 %v134
    %174 = vmatprep.subr.mxu0 0.0
    %175 = vmatpush1.msra.mxu0 0.0
    %176 = vmatprep.subr.mxu0 0.0
    %177 = vmatpush1.msra.mxu0 0.0
    %178 = vmatprep.subr.mxu0 0.0
    %179 = vmatpush1.msra.mxu0 0.0
    %180 = vmatprep.subr.mxu0 0.0
    %181 = vmatpush1.msra.mxu0 0.0
    %182 = vmatprep.subr.mxu0 0.0
    %183 = vmatpush1.msra.mxu0 0.0
    %184 = vmatprep.subr.mxu0 0.0
    %185 = vmatpush1.msra.mxu0 0.0
    %186 = vmatprep.subr.mxu0 0.0
    %187 = vmatpush1.msra.mxu0 0.0
    %188 = vmatprep.subr.mxu0 0.0
    %189 = vmatpush1.msra.mxu0 0.0
    %190 = vmatprep.subr.mxu0 0.0
    %191 = vmatpush1.msra.mxu0 0.0
    %192 = vmatprep.subr.mxu0 0.0
    %193 = vmatpush1.msra.mxu0 0.0
    %194 = vmatprep.subr.mxu0 0.0
    %195 = vmatpush1.msra.mxu0 0.0
    %196 = vmatprep.subr.mxu0 0.0
    %197 = vmatpush1.msra.mxu0 0.0
    %198 = vmatprep.subr.mxu0 0.0
    %199 = vmatpush1.msra.mxu0 0.0
    %200 = vmatprep.subr.mxu0 0.0
    %201 = vmatpush1.msra.mxu0 0.0
    %202 = vmatprep.subr.mxu0 0.0
    %203 = vmatpush1.msra.mxu0 0.0
    %204 = vmatprep.subr.mxu0 0.0
    %205 = vmatpush1.msra.mxu0 0.0
    %206 = vmatprep.mubr.f32.mxu0 0.0
    %207 = vmatmul.mubr.f32.gmra.mrb[0].mxu0 %v118
    %v208 = vpop.f32.mrb[0].mxu0
    %v209 = vadd.f32 %v140, %v208
    %v210 = vpop.f32.mrb[0].mxu0
    %211 = vdwg.mxu0
    %v212 = vtanh.pop %v209
    %v213 = vrot.slane %v212, 4
    %v214 = vmax.f32 %v212, %v213
    %v215 = vrot.slane %v214, 2
    %v216 = vmax.f32 %v214, %v215
    %v217 = vrot.slane %v216, 1
    %v218 = vmax.f32 %v216, %v217
    %v219 = vld [vmem:[#allocation9] sm:$0xff]
    %v220 = vld [vmem:[#allocation9 + $0x8] sm:$0xff]
    %v221 = vld [vmem:[#allocation9 + $0x10] sm:$0xff]
    %v222 = vld [vmem:[#allocation9 + $0x18] sm:$0xff]
    %v223 = vld [vmem:[#allocation9 + $0x20] sm:$0xff]
    %v224 = vld [vmem:[#allocation9 + $0x28] sm:$0xff]
    %v225 = vld [vmem:[#allocation9 + $0x30] sm:$0xff]
    %v226 = vld [vmem:[#allocation9 + $0x38] sm:$0xff]
    %v227 = vld [vmem:[#allocation9 + $0x40] sm:$0xff]
    %v228 = vld [vmem:[#allocation9 + $0x48] sm:$0xff]
    %v229 = vld [vmem:[#allocation9 + $0x50] sm:$0xff]
    %v230 = vld [vmem:[#allocation9 + $0x58] sm:$0xff]
    %v231 = vld [vmem:[#allocation9 + $0x60] sm:$0xff]
    %v232 = vld [vmem:[#allocation9 + $0x68] sm:$0xff]
    %v233 = vld [vmem:[#allocation9 + $0x70] sm:$0xff]
    %v234 = vld [vmem:[#allocation9 + $0x78] sm:$0xff]
    %v235 = vld [vmem:[%s5] sm:$0x1]
    %236 = vmatprep.subr.mxu0 0.0
    %237 = vmatpush1.msra.mxu0 %v219
    %238 = vmatprep.subr.mxu0 0.0
    %239 = vmatpush1.msra.mxu0 %v220
    %240 = vmatprep.subr.mxu0 0.0
    %241 = vmatpush1.msra.mxu0 %v221
    %242 = vmatprep.subr.mxu0 0.0
    %243 = vmatpush1.msra.mxu0 %v222
    %244 = vmatprep.subr.mxu0 0.0
    %245 = vmatpush1.msra.mxu0 %v223
    %246 = vmatprep.subr.mxu0 0.0
    %247 = vmatpush1.msra.mxu0 %v224
    %248 = vmatprep.subr.mxu0 0.0
    %249 = vmatpush1.msra.mxu0 %v225
    %250 = vmatprep.subr.mxu0 0.0
    %251 = vmatpush1.msra.mxu0 %v226
    %252 = vmatprep.subr.mxu0 0.0
    %253 = vmatpush1.msra.mxu0 %v227
    %254 = vmatprep.subr.mxu0 0.0
    %255 = vmatpush1.msra.mxu0 %v228
    %256 = vmatprep.subr.mxu0 0.0
    %257 = vmatpush1.msra.mxu0 %v229
    %258 = vmatprep.subr.mxu0 0.0
    %259 = vmatpush1.msra.mxu0 %v230
    %260 = vmatprep.subr.mxu0 0.0
    %261 = vmatpush1.msra.mxu0 %v231
    %262 = vmatprep.subr.mxu0 0.0
    %263 = vmatpush1.msra.mxu0 %v232
    %264 = vmatprep.subr.mxu0 0.0
    %265 = vmatpush1.msra.mxu0 %v233
    %266 = vmatprep.subr.mxu0 0.0
    %267 = vmatpush1.msra.mxu0 %v234
    %268 = vmatprep.subr.mxu0 0.0
    %269 = vmatpush1.msra.mxu0 0.0
    %270 = vmatprep.subr.mxu0 0.0
    %271 = vmatpush1.msra.mxu0 0.0
    %272 = vmatprep.subr.mxu0 0.0
    %273 = vmatpush1.msra.mxu0 0.0
    %274 = vmatprep.subr.mxu0 0.0
    %275 = vmatpush1.msra.mxu0 0.0
    %276 = vmatprep.subr.mxu0 0.0
    %277 = vmatpush1.msra.mxu0 0.0
    %278 = vmatprep.subr.mxu0 0.0
    %279 = vmatpush1.msra.mxu0 0.0
    %280 = vmatprep.subr.mxu0 0.0
    %281 = vmatpush1.msra.mxu0 0.0
    %282 = vmatprep.subr.mxu0 0.0
    %283 = vmatpush1.msra.mxu0 0.0
    %284 = vmatprep.subr.mxu0 0.0
    %285 = vmatpush1.msra.mxu0 0.0
    %286 = vmatprep.subr.mxu0 0.0
    %287 = vmatpush1.msra.mxu0 0.0
    %288 = vmatprep.subr.mxu0 0.0
    %289 = vmatpush1.msra.mxu0 0.0
    %290 = vmatprep.subr.mxu0 0.0
    %291 = vmatpush1.msra.mxu0 0.0
    %292 = vmatprep.subr.mxu0 0.0
    %293 = vmatpush1.msra.mxu0 0.0
    %294 = vmatprep.subr.mxu0 0.0
    %295 = vmatpush1.msra.mxu0 0.0
    %296 = vmatprep.subr.mxu0 0.0
    %297 = vmatpush1.msra.mxu0 0.0
    %298 = vmatprep.subr.mxu0 0.0
    %299 = vmatpush1.msra.mxu0 0.0
    %300 = vmatprep.mubr.f32.mxu0 0.0
    %301 = vmatmul.mubr.f32.gmra.mrb[0].mxu0 %v218
    %v302 = vpop.f32.mrb[0].mxu0
    %v303 = vadd.f32 %v235, %v302
    %v304 = vpop.f32.mrb[0].mxu0
    %305 = vdwg.mxu0
    %v306 = vtanh.pop %v303
    %v307 = vld [vmem:[%s1] sm:$0xff]
    %v308 = vld [vmem:[%s1 + $0x8] sm:$0xff]
    %v309 = vld [vmem:[%s1 + $0x10] sm:$0xff]
    %v310 = vld [vmem:[%s1 + $0x18] sm:$0xff]
    %v311 = vld [vmem:[%s1 + $0x20] sm:$0xff]
    %v312 = vld [vmem:[#allocation10] sm:$0xff]
    %v313 = vld [vmem:[#allocation10 + $0x8] sm:$0xff]
    %v314 = vld [vmem:[#allocation10 + $0x10] sm:$0xff]
    %v315 = vld [vmem:[#allocation10 + $0x18] sm:$0xff]
    %v316 = vld [vmem:[#allocation10 + $0x20] sm:$0xff]
    %v317 = vld [vmem:[#allocation10 + $0x28] sm:$0xff]
    %v318 = vld [vmem:[#allocation10 + $0x30] sm:$0xff]
    %v319 = vld [vmem:[#allocation10 + $0x38] sm:$0xff]
    %v320 = vld [vmem:[#allocation10 + $0x40] sm:$0xff]
    %v321 = vld [vmem:[#allocation10 + $0x48] sm:$0xff]
    %v322 = vld [vmem:[#allocation10 + $0x50] sm:$0xff]
    %v323 = vld [vmem:[#allocation10 + $0x58] sm:$0xff]
    %v324 = vld [vmem:[#allocation10 + $0x60] sm:$0xff]
    %v325 = vld [vmem:[#allocation10 + $0x68] sm:$0xff]
    %v326 = vld [vmem:[#allocation10 + $0x70] sm:$0xff]
    %v327 = vld [vmem:[#allocation10 + $0x78] sm:$0xff]
    %v328 = vld [vmem:[%s7] sm:$0x1]
    %v330 = vlaneseq
    %v331 = vshrl.u32 %v330, 7
    %v332 = vsub.s32 0, %v331
    %v333 = vrot.slane %v328, %v332
    %335 = vmatprep.subr.mxu0 0.0
    %336 = vmatpush1.msra.mxu0 %v312
    %337 = vmatprep.subr.mxu0 0.0
    %338 = vmatpush1.msra.mxu0 %v313
    %339 = vmatprep.subr.mxu0 0.0
    %340 = vmatpush1.msra.mxu0 %v314
    %341 = vmatprep.subr.mxu0 0.0
    %342 = vmatpush1.msra.mxu0 %v315
    %343 = vmatprep.subr.mxu0 0.0
    %344 = vmatpush1.msra.mxu0 %v316
    %345 = vmatprep.subr.mxu0 0.0
    %346 = vmatpush1.msra.mxu0 %v317
    %347 = vmatprep.subr.mxu0 0.0
    %348 = vmatpush1.msra.mxu0 %v318
    %349 = vmatprep.subr.mxu0 0.0
    %350 = vmatpush1.msra.mxu0 %v319
    %351 = vmatprep.subr.mxu0 0.0
    %352 = vmatpush1.msra.mxu0 %v320
    %353 = vmatprep.subr.mxu0 0.0
    %354 = vmatpush1.msra.mxu0 %v321
    %355 = vmatprep.subr.mxu0 0.0
    %356 = vmatpush1.msra.mxu0 %v322
    %357 = vmatprep.subr.mxu0 0.0
    %358 = vmatpush1.msra.mxu0 %v323
    %359 = vmatprep.subr.mxu0 0.0
    %360 = vmatpush1.msra.mxu0 %v324
    %361 = vmatprep.subr.mxu0 0.0
    %362 = vmatpush1.msra.mxu0 %v325
    %363 = vmatprep.subr.mxu0 0.0
    %364 = vmatpush1.msra.mxu0 %v326
    %365 = vmatprep.subr.mxu0 0.0
    %366 = vmatpush1.msra.mxu0 %v327
    %367 = vmatprep.subr.mxu0 0.0
    %368 = vmatpush1.msra.mxu0 0.0
    %369 = vmatprep.subr.mxu0 0.0
    %370 = vmatpush1.msra.mxu0 0.0
    %371 = vmatprep.subr.mxu0 0.0
    %372 = vmatpush1.msra.mxu0 0.0
    %373 = vmatprep.subr.mxu0 0.0
    %374 = vmatpush1.msra.mxu0 0.0
    %375 = vmatprep.subr.mxu0 0.0
    %376 = vmatpush1.msra.mxu0 0.0
    %377 = vmatprep.subr.mxu0 0.0
    %378 = vmatpush1.msra.mxu0 0.0
    %379 = vmatprep.subr.mxu0 0.0
    %380 = vmatpush1.msra.mxu0 0.0
    %381 = vmatprep.subr.mxu0 0.0
    %382 = vmatpush1.msra.mxu0 0.0
    %383 = vmatprep.subr.mxu0 0.0
    %384 = vmatpush1.msra.mxu0 0.0
    %385 = vmatprep.subr.mxu0 0.0
    %386 = vmatpush1.msra.mxu0 0.0
    %387 = vmatprep.subr.mxu0 0.0
    %388 = vmatpush1.msra.mxu0 0.0
    %389 = vmatprep.subr.mxu0 0.0
    %390 = vmatpush1.msra.mxu0 0.0
    %391 = vmatprep.subr.mxu0 0.0
    %392 = vmatpush1.msra.mxu0 0.0
    %393 = vmatprep.subr.mxu0 0.0
    %394 = vmatpush1.msra.mxu0 0.0
    %395 = vmatprep.subr.mxu0 0.0
    %396 = vmatpush1.msra.mxu0 0.0
    %397 = vmatprep.subr.mxu0 0.0
    %398 = vmatpush1.msra.mxu0 0.0
    %399 = vmatprep.mubr.f32.mxu0 0.0
    %400 = vmatmul.mubr.f32.gmra.mrb[0].mxu0 %v307
    %v401 = vpop.f32.mrb[0].mxu0
    %v402 = vadd.f32 %v333, %v401
    %v403 = vpop.f32.mrb[0].mxu0
    %404 = vmatprep.mubr.f32.mxu0 0.0
    %405 = vmatmul.mubr.f32.gmra.mrb[0].mxu0 %v308
    %v406 = vpop.f32.mrb[0].mxu0
    %v407 = vadd.f32 %v333, %v406
    %v408 = vpop.f32.mrb[0].mxu0
    %409 = vmatprep.mubr.f32.mxu0 0.0
    %410 = vmatmul.mubr.f32.gmra.mrb[0].mxu0 %v309
    %v411 = vpop.f32.mrb[0].mxu0
    %v412 = vadd.f32 %v333, %v411
    %v413 = vpop.f32.mrb[0].mxu0
    %414 = vmatprep.mubr.f32.mxu0 0.0
    %415 = vmatmul.mubr.f32.gmra.mrb[0].mxu0 %v310
    %v416 = vpop.f32.mrb[0].mxu0
    %v417 = vadd.f32 %v333, %v416
    %v418 = vpop.f32.mrb[0].mxu0
    %419 = vmatprep.mubr.f32.mxu0 0.0
    %420 = vmatmul.mubr.f32.gmra.mrb[0].mxu0 %v311
    %v421 = vpop.f32.mrb[0].mxu0
    %v422 = vadd.f32 %v333, %v421
    %v423 = vpop.f32.mrb[0].mxu0
    %424 = vdwg.mxu0
    %v425 = vtanh.pop %v402
    %v426 = vtanh.pop %v407
    %v427 = vtanh.pop %v412
    %v428 = vtanh.pop %v417
    %v429 = vtanh.pop %v422
    %v430 = vrot.slane %v425, 4
    %v431 = vmax.f32 %v425, %v430
    %v432 = vrot.slane %v431, 2
    %v433 = vmax.f32 %v431, %v432
    %v434 = vrot.slane %v433, 1
    %v435 = vmax.f32 %v433, %v434
    %436 = vst [vmem:[#allocation2] sm:$0x1] %v435
    %v437 = vrot.slane %v426, 4
    %v438 = vmax.f32 %v426, %v437
    %v439 = vrot.slane %v438, 2
    %v440 = vmax.f32 %v438, %v439
    %v441 = vrot.slane %v440, 1
    %v442 = vmax.f32 %v440, %v441
    %443 = vst [vmem:[#allocation2 + $0x1] sm:$0x1] %v442
    %v444 = vrot.slane %v427, 4
    %v445 = vmax.f32 %v427, %v444
    %v446 = vrot.slane %v445, 2
    %v447 = vmax.f32 %v445, %v446
    %v448 = vrot.slane %v447, 1
    %v449 = vmax.f32 %v447, %v448
    %450 = vst [vmem:[#allocation2 + $0x2] sm:$0x1] %v449
    %v451 = vrot.slane %v428, 4
    %v452 = vmax.f32 %v428, %v451
    %v453 = vrot.slane %v452, 2
    %v454 = vmax.f32 %v452, %v453
    %v455 = vrot.slane %v454, 1
    %v456 = vmax.f32 %v454, %v455
    %457 = vst [vmem:[#allocation2 + $0x3] sm:$0x1] %v456
    %v458 = vrot.slane %v429, 4
    %v459 = vmax.f32 %v429, %v458
    %v460 = vrot.slane %v459, 2
    %v461 = vmax.f32 %v459, %v460
    %v462 = vrot.slane %v461, 1
    %v463 = vmax.f32 %v461, %v462
    %464 = vst [vmem:[#allocation2 + $0x4] sm:$0x1] %v463
    %v465 = vld [vmem:[#allocation2] sm:$0x1f]
    %v466 = vld [vmem:[#allocation12] sm:$0xff]
    %v467 = vld [vmem:[#allocation12 + $0x8] sm:$0xff]
    %v468 = vld [vmem:[#allocation12 + $0x10] sm:$0xff]
    %v469 = vld [vmem:[#allocation12 + $0x18] sm:$0xff]
    %v470 = vld [vmem:[#allocation12 + $0x20] sm:$0xff]
    %v471 = vld [vmem:[#allocation12 + $0x28] sm:$0xff]
    %v472 = vld [vmem:[#allocation12 + $0x30] sm:$0xff]
    %v473 = vld [vmem:[#allocation12 + $0x38] sm:$0xff]
    %v474 = vld [vmem:[#allocation12 + $0x40] sm:$0xff]
    %v475 = vld [vmem:[#allocation12 + $0x48] sm:$0xff]
    %v476 = vld [vmem:[#allocation12 + $0x50] sm:$0xff]
    %v477 = vld [vmem:[#allocation12 + $0x58] sm:$0xff]
    %v478 = vld [vmem:[#allocation12 + $0x60] sm:$0xff]
    %v479 = vld [vmem:[#allocation12 + $0x68] sm:$0xff]
    %v480 = vld [vmem:[#allocation12 + $0x70] sm:$0xff]
    %v481 = vld [vmem:[#allocation12 + $0x78] sm:$0xff]
    %v482 = vld [vmem:[%s9] sm:$0x1]
    %v484 = vlaneseq
    %v485 = vshrl.u32 %v484, 7
    %v486 = vsub.s32 0, %v485
    %v487 = vrot.slane %v482, %v486
    %489 = vmatprep.subr.mxu0 0.0
    %490 = vmatpush1.msra.mxu0 %v466
    %491 = vmatprep.subr.mxu0 0.0
    %492 = vmatpush1.msra.mxu0 %v467
    %493 = vmatprep.subr.mxu0 0.0
    %494 = vmatpush1.msra.mxu0 %v468
    %495 = vmatprep.subr.mxu0 0.0
    %496 = vmatpush1.msra.mxu0 %v469
    %497 = vmatprep.subr.mxu0 0.0
    %498 = vmatpush1.msra.mxu0 %v470
    %499 = vmatprep.subr.mxu0 0.0
    %500 = vmatpush1.msra.mxu0 %v471
    %501 = vmatprep.subr.mxu0 0.0
    %502 = vmatpush1.msra.mxu0 %v472
    %503 = vmatprep.subr.mxu0 0.0
    %504 = vmatpush1.msra.mxu0 %v473
    %505 = vmatprep.subr.mxu0 0.0
    %506 = vmatpush1.msra.mxu0 %v474
    %507 = vmatprep.subr.mxu0 0.0
    %508 = vmatpush1.msra.mxu0 %v475
    %509 = vmatprep.subr.mxu0 0.0
    %510 = vmatpush1.msra.mxu0 %v476
    %511 = vmatprep.subr.mxu0 0.0
    %512 = vmatpush1.msra.mxu0 %v477
    %513 = vmatprep.subr.mxu0 0.0
    %514 = vmatpush1.msra.mxu0 %v478
    %515 = vmatprep.subr.mxu0 0.0
    %516 = vmatpush1.msra.mxu0 %v479
    %517 = vmatprep.subr.mxu0 0.0
    %518 = vmatpush1.msra.mxu0 %v480
    %519 = vmatprep.subr.mxu0 0.0
    %520 = vmatpush1.msra.mxu0 %v481
    %521 = vmatprep.subr.mxu0 0.0
    %522 = vmatpush1.msra.mxu0 0.0
    %523 = vmatprep.subr.mxu0 0.0
    %524 = vmatpush1.msra.mxu0 0.0
    %525 = vmatprep.subr.mxu0 0.0
    %526 = vmatpush1.msra.mxu0 0.0
    %527 = vmatprep.subr.mxu0 0.0
    %528 = vmatpush1.msra.mxu0 0.0
    %529 = vmatprep.subr.mxu0 0.0
    %530 = vmatpush1.msra.mxu0 0.0
    %531 = vmatprep.subr.mxu0 0.0
    %532 = vmatpush1.msra.mxu0 0.0
    %533 = vmatprep.subr.mxu0 0.0
    %534 = vmatpush1.msra.mxu0 0.0
    %535 = vmatprep.subr.mxu0 0.0
    %536 = vmatpush1.msra.mxu0 0.0
    %537 = vmatprep.subr.mxu0 0.0
    %538 = vmatpush1.msra.mxu0 0.0
    %539 = vmatprep.subr.mxu0 0.0
    %540 = vmatpush1.msra.mxu0 0.0
    %541 = vmatprep.subr.mxu0 0.0
    %542 = vmatpush1.msra.mxu0 0.0
    %543 = vmatprep.subr.mxu0 0.0
    %544 = vmatpush1.msra.mxu0 0.0
    %545 = vmatprep.subr.mxu0 0.0
    %546 = vmatpush1.msra.mxu0 0.0
    %547 = vmatprep.subr.mxu0 0.0
    %548 = vmatpush1.msra.mxu0 0.0
    %549 = vmatprep.subr.mxu0 0.0
    %550 = vmatpush1.msra.mxu0 0.0
    %551 = vmatprep.subr.mxu0 0.0
    %552 = vmatpush1.msra.mxu0 0.0
    %553 = vmatprep.mubr.f32.mxu0 0.0
    %554 = vmatmul.mubr.f32.gmra.mrb[0].mxu0 %v465
    %v555 = vpop.f32.mrb[0].mxu0
    %v556 = vadd.f32 %v487, %v555
    %v557 = vpop.f32.mrb[0].mxu0
    %558 = vdwg.mxu0
    %v559 = vtanh.pop %v556
    %560 = vmatprep.subr.mxu0 0.0
    %561 = vmatpush1.xpose.msra.mxu0 %v559
    %562 = vmatprep.subr.mxu0 0.0
    %563 = vmatpush1.xpose.msra.mxu0 0.0
    %564 = vmatprep.subr.mxu0 0.0
    %565 = vmatpush1.xpose.msra.mxu0 0.0
    %566 = vmatprep.subr.mxu0 0.0
    %567 = vmatpush1.xpose.msra.mxu0 0.0
    %568 = vmatprep.subr.mxu0 0.0
    %569 = vmatpush1.xpose.msra.mxu0 0.0
    %570 = vmatprep.subr.mxu0 0.0
    %571 = vmatpush1.xpose.msra.mxu0 0.0
    %572 = vmatprep.subr.mxu0 0.0
    %573 = vmatpush1.xpose.msra.mxu0 0.0
    %574 = vmatprep.subr.mxu0 0.0
    %575 = vmatpush1.xpose.msra.mxu0 0.0
    %576 = vmatprep.subr.mxu0 0.0
    %577 = vmatpush1.xpose.msra.mxu0 0.0
    %578 = vmatprep.subr.mxu0 0.0
    %579 = vmatpush1.xpose.msra.mxu0 0.0
    %580 = vmatprep.subr.mxu0 0.0
    %581 = vmatpush1.xpose.msra.mxu0 0.0
    %582 = vmatprep.subr.mxu0 0.0
    %583 = vmatpush1.xpose.msra.mxu0 0.0
    %584 = vmatprep.subr.mxu0 0.0
    %585 = vmatpush1.xpose.msra.mxu0 0.0
    %586 = vmatprep.subr.mxu0 0.0
    %587 = vmatpush1.xpose.msra.mxu0 0.0
    %588 = vmatprep.subr.mxu0 0.0
    %589 = vmatpush1.xpose.msra.mxu0 0.0
    %590 = vmatprep.subr.mxu0 0.0
    %591 = vmatpush1.xpose.msra.mxu0 0.0
    %592 = vmatprep.subr.mxu0 0.0
    %593 = vmatpush1.xpose.msra.mxu0 0.0
    %594 = vmatprep.subr.mxu0 0.0
    %595 = vmatpush1.xpose.msra.mxu0 0.0
    %596 = vmatprep.subr.mxu0 0.0
    %597 = vmatpush1.xpose.msra.mxu0 0.0
    %598 = vmatprep.subr.mxu0 0.0
    %599 = vmatpush1.xpose.msra.mxu0 0.0
    %600 = vmatprep.subr.mxu0 0.0
    %601 = vmatpush1.xpose.msra.mxu0 0.0
    %602 = vmatprep.subr.mxu0 0.0
    %603 = vmatpush1.xpose.msra.mxu0 0.0
    %604 = vmatprep.subr.mxu0 0.0
    %605 = vmatpush1.xpose.msra.mxu0 0.0
    %606 = vmatprep.subr.mxu0 0.0
    %607 = vmatpush1.xpose.msra.mxu0 0.0
    %608 = vmatprep.subr.mxu0 0.0
    %609 = vmatpush1.xpose.msra.mxu0 0.0
    %610 = vmatprep.subr.mxu0 0.0
    %611 = vmatpush1.xpose.msra.mxu0 0.0
    %612 = vmatprep.subr.mxu0 0.0
    %613 = vmatpush1.xpose.msra.mxu0 0.0
    %614 = vmatprep.subr.mxu0 0.0
    %615 = vmatpush1.xpose.msra.mxu0 0.0
    %616 = vmatprep.subr.mxu0 0.0
    %617 = vmatpush1.xpose.msra.mxu0 0.0
    %618 = vmatprep.subr.mxu0 0.0
    %619 = vmatpush1.xpose.msra.mxu0 0.0
    %620 = vmatprep.subr.mxu0 0.0
    %621 = vmatpush1.xpose.msra.mxu0 0.0
    %622 = vmatprep.subr.mxu0 0.0
    %623 = vmatpush1.xpose.msra.mxu0 0.0
    %624 = vmatprep.mubr.f32.mxu0 0.0
    %625 = vmatmul.mubr.f32.gmra.mrb[0].mxu0 %v306
    %v626 = vpop.f32.mrb[0].mxu0
    %v627 = vadd.f32 0.0, %v626
    %v628 = vpop.f32.mrb[0].mxu0
    %629 = vdwg.mxu0
    %s630 = sld [smem:[#allocation13]]
    %v631 = vstv %s630
    %v632 = vmul.f32 %v631, %v627
    %s633 = sld [smem:[#allocation13 + $0x1]]
    %v634 = vstv %s633
    %v635 = vadd.f32 %v632, %v634
    %vm636 = vcmask 32768
    %637 = vst.msk [vmem:[#allocation14] sm:$0x1] %vm636, %v635
    // Predicated region
    $region70: #{cdssm_forward.1} parent=1 // pred_check
      _
    $region71: #{cdssm_forward.1} parent=1 // pred_check_branch
      %639 = sbr.rel (0) target = $region73
    $region72: #{cdssm_forward.1} parent=1 // pred_region
      %s641 = ssub.s32 16, 16
      %642 = vsyncadd [#allocation5], %s641
      %s644 = sshll.u32 [#allocation14], 4
      %s645 = int_to_ptr.vmem [resolvable:$true] %s644
      %647 = dma.vmem_to_hbm [thread:$0]  %s645, 16, %s11, [#allocation5]
    $region73: #{cdssm_forward.1} parent=1 // pred_fallthru
      _
    // Predicated region
    $region74: #{cdssm_forward.1} parent=1 // pred_check
      _
    $region75: #{cdssm_forward.1} parent=1 // pred_check_branch
      %649 = sbr.rel (0) target = $region77
    $region76: #{cdssm_forward.1} parent=1 // pred_region
      %650 = dma.done [#allocation5], 16
    $region77: #{cdssm_forward.1} parent=1 // pred_fallthru
      _
    %651 = vsyncpa [#allocation4], 1
    %652 = vsyncpa [#allocation8], 1
    %653 = vsyncpa [#allocation11], 1
    %654 = vsyncpa [#allocation5], 1
    %655 = vsyncpa [#allocation6], 1

</llo_original>
